<compile_context>
chip_gen: v7x
topology: tpu7x:2x2x1
jax: 0.10.0
libtpu: 0.0.40
codegen_flags: <defaults>
</compile_context>

<pallas_src>
import numpy as np
import jax
import jax.numpy as jnp
from jax.experimental import pallas as pl
from jax.experimental.pallas import tpu as pltpu


_VMEM_LIMIT = 32 * 1024 * 1024       # explicit scoped-VMEM bound (safe on v5e/v6e/v7x)
_COMPUTE_DTYPE = jnp.bfloat16        # MXU operand dtype (accumulation stays f32)


def _largest_divisor_leq(n, target):
    t = max(1, min(n, target))
    while n % t:
        t -= 1
    return t


# ----------------------------------------------------------------------------
# Pallas kernels / wrappers
# ----------------------------------------------------------------------------

def proj_width_resize(tokens, w_comb, rw, *, hi, wi, wo, hi_tile=8):
    """Channel projection (folded MLP@linear_fuse block) + bilinear width resize.

    tokens : (N, Hi*Wi, Ci) bf16, h-major tokens of one pyramid level
    w_comb : (Ci, E) bf16     folded projection weight
    rw     : (Wo, Wi) f32     1-D bilinear width-resize matrix
    returns: (N, Hi, Wo, E) bf16
    """
    N, Li, Ci = tokens.shape
    E = w_comb.shape[1]
    ht = _largest_divisor_leq(hi, hi_tile)
    grid = (N, hi // ht)
    # broadcast Rw over the height-tile so the width pass is a standard batched
    # matmul (keeps h as a batch dim -> no in-kernel transpose on the result).
    rw_tile = jnp.broadcast_to(rw.astype(_COMPUTE_DTYPE)[None], (ht, wo, wi))

    def kernel(t_ref, w_ref, rw_ref, o_ref):
        # (ht*wi, Ci) @ (Ci, E) -> (ht*wi, E), f32 accumulation on the MXU
        p = jnp.dot(t_ref[...], w_ref[...], preferred_element_type=jnp.float32)
        p = p.reshape(ht, wi, E).astype(_COMPUTE_DTYPE)          # leading-dim split: free
        # width resize: batch over height rows, contract Wi
        yw = jnp.einsum('hvw,hwe->hve', rw_ref[...], p,
                        preferred_element_type=jnp.float32)      # (ht, Wo, E)
        o_ref[...] = yw.astype(o_ref.dtype)

    flops = 2 * N * (Li * Ci * E + hi * wo * wi * E)
    bytes_acc = 2 * (tokens.size + N * hi * wo * E + w_comb.size + rw_tile.size)
    return pl.pallas_call(
        kernel,
        out_shape=jax.ShapeDtypeStruct((N, hi, wo, E), _COMPUTE_DTYPE),
        grid=grid,
        in_specs=[
            pl.BlockSpec((None, ht * wi, Ci), lambda n, j: (n, j, 0)),
            pl.BlockSpec((Ci, E), lambda n, j: (0, 0)),
            pl.BlockSpec((ht, wo, wi), lambda n, j: (0, 0, 0)),
        ],
        out_specs=pl.BlockSpec((None, ht, wo, E), lambda n, j: (n, j, 0, 0)),
        compiler_params=pltpu.CompilerParams(
            dimension_semantics=("parallel", "parallel"),
            vmem_limit_bytes=_VMEM_LIMIT),
        cost_estimate=pl.CostEstimate(flops=int(flops), transcendentals=0,
                                      bytes_accessed=int(bytes_acc)),
    )(tokens, w_comb, rw_tile)


def height_resize(y, rh, *, ho, ho_tile=8):
    """Bilinear height resize as a single 2D matmul per (batch, height-tile).

    y  : (N, Hi, Wo*E) bf16   (width-resized, lane-merged)
    rh : (Ho, Hi) f32
    returns: (N, Ho, Wo*E) bf16  -- lane-dense output tiles
    """
    N, Hi, WE = y.shape
    ht = _largest_divisor_leq(ho, ho_tile)
    grid = (N, ho // ht)

    def kernel(y_ref, rh_ref, o_ref):
        o_ref[...] = jnp.dot(rh_ref[...], y_ref[...],
                             preferred_element_type=jnp.float32).astype(o_ref.dtype)

    flops = 2 * N * ho * Hi * WE
    bytes_acc = 2 * (y.size + N * ho * WE + rh.size)
    return pl.pallas_call(
        kernel,
        out_shape=jax.ShapeDtypeStruct((N, ho, WE), _COMPUTE_DTYPE),
        grid=grid,
        in_specs=[
            # same block index across j -> DMA'd once per n (Pallas revisit skip)
            pl.BlockSpec((None, Hi, WE), lambda n, j: (n, 0, 0)),
            pl.BlockSpec((ht, Hi), lambda n, j: (j, 0)),
        ],
        out_specs=pl.BlockSpec((None, ht, WE), lambda n, j: (n, j, 0)),
        compiler_params=pltpu.CompilerParams(
            dimension_semantics=("parallel", "parallel"),
            vmem_limit_bytes=_VMEM_LIMIT),
        cost_estimate=pl.CostEstimate(flops=int(flops), transcendentals=0,
                                      bytes_accessed=int(bytes_acc)),
    )(y, rh.astype(_COMPUTE_DTYPE))


def fuse_predict(y_levels, t1, w1, wpt, bias_col, *, l_tile=128):
    """Sum the per-level contributions, fuse the c1 projection, and apply the folded
    BN+linear_pred weight.  Output is channels-first (lane-dense over tokens).

    y_levels : 3 arrays (N, L1, E) bf16  (c4, c3, c2 contributions)
    t1       : (N, L1, C1) bf16          raw c1 tokens (identity resize)
    w1       : (C1, E) bf16              folded c1 projection
    wpt      : (K, E) bf16               folded (BN * linear_pred) weight, transposed
    bias_col : (K, 1) f32                folded total bias
    returns  : (N, K, L1) f32
    """
    y4, y3, y2 = y_levels
    N, L1, E = y4.shape
    C1 = t1.shape[2]
    K = wpt.shape[0]
    lt = _largest_divisor_leq(L1, l_tile)
    grid = (N, L1 // lt)

    def kernel(y4_ref, y3_ref, y2_ref, t1_ref, w1_ref, wpt_ref, b_ref, o_ref):
        # accumulate level contributions in f32 (v5e has no bf16 VPU)
        z = (y4_ref[...].astype(jnp.float32)
             + y3_ref[...].astype(jnp.float32)
             + y2_ref[...].astype(jnp.float32))
        z = z + jnp.dot(t1_ref[...], w1_ref[...], preferred_element_type=jnp.float32)
        # (K, E) x (L_t, E) contracting E -> (K, L_t): lane-dense channels-first output
        out = jax.lax.dot_general(
            wpt_ref[...], z.astype(_COMPUTE_DTYPE),
            dimension_numbers=(((1,), (1,)), ((), ())),
            preferred_element_type=jnp.float32)
        o_ref[...] = out + b_ref[...]

    flops = 2 * N * L1 * (C1 * E + E * K) + 3 * N * L1 * E
    bytes_acc = 2 * (y4.size * 3 + t1.size) + 4 * N * K * L1
    return pl.pallas_call(
        kernel,
        out_shape=jax.ShapeDtypeStruct((N, K, L1), jnp.float32),
        grid=grid,
        in_specs=[
            pl.BlockSpec((None, lt, E), lambda n, j: (n, j, 0)),
            pl.BlockSpec((None, lt, E), lambda n, j: (n, j, 0)),
            pl.BlockSpec((None, lt, E), lambda n, j: (n, j, 0)),
            pl.BlockSpec((None, lt, C1), lambda n, j: (n, j, 0)),
            pl.BlockSpec((C1, E), lambda n, j: (0, 0)),
            pl.BlockSpec((K, E), lambda n, j: (0, 0)),
            pl.BlockSpec((K, 1), lambda n, j: (0, 0)),
        ],
        out_specs=pl.BlockSpec((None, K, lt), lambda n, j: (n, 0, j)),
        compiler_params=pltpu.CompilerParams(
            dimension_semantics=("parallel", "parallel"),
            vmem_limit_bytes=_VMEM_LIMIT),
        cost_estimate=pl.CostEstimate(flops=int(flops), transcendentals=0,
                                      bytes_accessed=int(bytes_acc)),
    )(y4, y3, y2, t1, w1, wpt, bias_col)


# ----------------------------------------------------------------------------
# Glue: bilinear matrices, stub encoder, parameters
# ----------------------------------------------------------------------------

def bilinear_matrix_1d(out_size, in_size):
    """PyTorch F.interpolate(mode='bilinear', align_corners=False), one axis."""
    if in_size == out_size:
        return np.eye(out_size, dtype=np.float32)
    scale = in_size / out_size
    dst = np.arange(out_size, dtype=np.float64)
    src = (dst + 0.5) * scale - 0.5
    src = np.maximum(src, 0.0)
    i0 = np.minimum(np.floor(src).astype(np.int64), in_size - 1)
    i1 = np.minimum(i0 + 1, in_size - 1)
    lam = (src - i0).astype(np.float32)
    R = np.zeros((out_size, in_size), dtype=np.float32)
    R[np.arange(out_size), i0] += (1.0 - lam)
    R[np.arange(out_size), i1] += lam
    return R


def stub_encoder(x, enc_projs, strides):
    # TODO(synk): stands in for the MiT transformer backbone (not provided).
    feats = []
    N, C, H, W = x.shape
    for s, Wp in zip(strides, enc_projs):
        pooled = x.reshape(N, C, H // s, s, W // s, s).mean(axis=(3, 5))
        feats.append(jnp.einsum('nchw,cd->ndhw', pooled, Wp))
    return feats


def init_params(key, in_channels, embedding_dim, num_classes, img_channels=3):
    ks = list(jax.random.split(key, 24))
    nxt = iter(ks)

    def rnd(shape, scale=0.05):
        return jax.random.normal(next(nxt), shape, jnp.float32) * scale

    params = {}
    params['enc'] = [rnd((img_channels, c), 0.3) for c in in_channels]
    params['mlp_W'] = [rnd((c, embedding_dim)) for c in in_channels]
    params['mlp_b'] = [rnd((1, embedding_dim)) for _ in in_channels]
    params['Wf'] = rnd((4 * embedding_dim, embedding_dim))
    params['bf'] = rnd((1, embedding_dim))
    params['bn_gamma'] = 1.0 + rnd((1, embedding_dim))
    params['bn_beta'] = rnd((1, embedding_dim))
    params['bn_mean'] = rnd((1, embedding_dim))
    params['bn_var'] = jnp.abs(rnd((1, embedding_dim))) + 1.0
    params['Wp'] = rnd((embedding_dim, num_classes))
    params['bp'] = rnd((1, num_classes))
    params['Wc'] = rnd((in_channels[-1], num_classes))   # classifier (unused by forward output)
    return params


# ----------------------------------------------------------------------------
# WeTr forward (Pallas) and pure-JAX reference
# ----------------------------------------------------------------------------

def wetr_forward(x, params, in_channels, embedding_dim, num_classes,
                 feature_strides=(4, 8, 16, 32), bn_eps=1e-5):
    feats = stub_encoder(x, params['enc'], feature_strides)      # c1..c4, NCHW f32
    c1 = feats[0]
    N = x.shape[0]
    H1, W1 = c1.shape[2], c1.shape[3]
    L1 = H1 * W1
    E = embedding_dim
    K = num_classes

    # --- host-side algebraic fold of linear_fuse + BN(eval) + all biases ----------
    Wf, bf = params['Wf'], params['bf']
    sc = params['bn_gamma'] / jnp.sqrt(params['bn_var'] + bn_eps)       # (1, E)
    sh = params['bn_beta'] - params['bn_mean'] * sc
    # concat order in the reference forward is [_c4, _c3, _c2, _c1]
    Wf_blocks = [Wf[0:E], Wf[E:2 * E], Wf[2 * E:3 * E], Wf[3 * E:4 * E]]
    lvl_order = [3, 2, 1, 0]                                            # c4, c3, c2, c1
    Wcomb = {i: params['mlp_W'][i] @ Wfb for i, Wfb in zip(lvl_order, Wf_blocks)}
    bias_total = bf + sum(params['mlp_b'][i] @ Wfb
                          for i, Wfb in zip(lvl_order, Wf_blocks))      # (1, E)
    Wp_eff = sc.reshape(E, 1) * params['Wp']                            # (E, K)
    bp_eff = (bias_total * sc + sh) @ params['Wp'] + params['bp']       # (1, K)

    # --- per-level separable resize (c4, c3, c2); c1 has identity resize ----------
    y_levels = []
    for i in (3, 2, 1):
        f = feats[i]
        Ci, Hi, Wi = f.shape[1], f.shape[2], f.shape[3]
        tokens = jnp.transpose(f.reshape(N, Ci, Hi * Wi), (0, 2, 1)).astype(_COMPUTE_DTYPE)
        Rh = jnp.asarray(bilinear_matrix_1d(H1, Hi))
        Rw = jnp.asarray(bilinear_matrix_1d(W1, Wi))
        yw = proj_width_resize(tokens, Wcomb[i].astype(_COMPUTE_DTYPE), Rw,
                               hi=Hi, wi=Wi, wo=W1)                     # (N, Hi, W1, E)
        yw = yw.reshape(N, Hi, W1 * E)                                  # metadata only
        yh = height_resize(yw, Rh, ho=H1)                               # (N, H1, W1*E)
        y_levels.append(yh.reshape(N, L1, E))                           # metadata only

    # c1: identity resize -> raw tokens, projection fused into the prediction kernel
    C1c = c1.shape[1]
    t1 = jnp.transpose(c1.reshape(N, C1c, L1), (0, 2, 1)).astype(_COMPUTE_DTYPE)

    # NOTE: the reference forward also computes `cls = self.classifier(_x4)` and
    # discards it; it does not affect the returned value, so it is skipped here.

    out_cf = fuse_predict(
        y_levels, t1,
        Wcomb[0].astype(_COMPUTE_DTYPE),
        jnp.transpose(Wp_eff).astype(_COMPUTE_DTYPE),
        bp_eff.reshape(K, 1).astype(jnp.float32))                       # (N, K, L1)
    return out_cf.reshape(N, K, H1, W1)                                 # NCHW, no transpose


def wetr_forward_ref(x, params, in_channels, embedding_dim, num_classes,
                     feature_strides=(4, 8, 16, 32), bn_eps=1e-5):
    """Pure-JAX f32 reference implementing the literal SegFormerHead math."""
    feats = stub_encoder(x, params['enc'], feature_strides)
    c1 = feats[0]
    N = x.shape[0]
    H1, W1 = c1.shape[2], c1.shape[3]
    E = embedding_dim
    resized = []
    for idx in (3, 2, 1, 0):
        f = feats[idx]
        Ci, Hi, Wi = f.shape[1], f.shape[2], f.shape[3]
        t = jnp.transpose(f.reshape(N, Ci, Hi * Wi), (0, 2, 1))
        p = t @ params['mlp_W'][idx] + params['mlp_b'][idx]
        p = p.reshape(N, Hi, Wi, E)
        Rh = jnp.asarray(bilinear_matrix_1d(H1, Hi))
        Rw = jnp.asarray(bilinear_matrix_1d(W1, Wi))
        p = jnp.einsum('oh,nhwe->nowe', Rh, p)
        p = jnp.einsum('vw,nowe->nove', Rw, p)
        resized.append(p.reshape(N, H1 * W1, E))
    c_cat = jnp.concatenate(resized, axis=-1)
    y = c_cat @ params['Wf'] + params['bf']
    sc = params['bn_gamma'] / jnp.sqrt(params['bn_var'] + bn_eps)
    sh = params['bn_beta'] - params['bn_mean'] * sc
    y = y * sc + sh                                  # BatchNorm2d (inference)
    y = y @ params['Wp'] + params['bp']              # Dropout2d is identity in eval
    return jnp.transpose(y, (0, 2, 1)).reshape(N, num_classes, H1, W1)


# ----------------------------------------------------------------------------
# Main
# ----------------------------------------------------------------------------

if __name__ == "__main__":
    key = jax.random.PRNGKey(0)
    k_x, k_p = jax.random.split(key)

    # small synthetic config
    in_channels = [8, 16, 32, 64]          # encoder embed_dims (c1..c4)
    embedding_dim = 32
    num_classes = 8
    N, H, W = 2, 64, 64                    # image; stride-4 feature is 16x16

    x = jax.random.normal(k_x, (N, 3, H, W), jnp.float32)
    params = init_params(k_p, in_channels, embedding_dim, num_classes)

    out = wetr_forward(x, params, in_channels, embedding_dim, num_classes)
    out = jax.block_until_ready(out)
    assert out.shape == (N, num_classes, H // 4, W // 4), out.shape

    ref = jax.block_until_ready(
        wetr_forward_ref(x, params, in_channels, embedding_dim, num_classes))
    # bf16 MXU operands with f32 accumulation: small tolerance vs the f32 reference
    np.testing.assert_allclose(np.asarray(out), np.asarray(ref), rtol=2e-2, atol=2e-3)

    print("KERNEL_OK")
</pallas_src>

<mosaic_0001>
module attributes {stable_mosaic.version = 11 : i64} {
  func.func @kernel(%arg0: i32, %arg1: i32, %arg2: memref<1x4x64xbf16, #tpu.memory_space<vmem>>, %arg3: memref<64x32xbf16, #tpu.memory_space<vmem>>, %arg4: memref<2x16x2xbf16, #tpu.memory_space<vmem>>, %arg5: memref<1x2x16x32xbf16, #tpu.memory_space<vmem>>) attributes {dimension_semantics = [#tpu.dimension_semantics<parallel>, #tpu.dimension_semantics<parallel>], iteration_bounds = array<i64: 2, 1>, scalar_prefetch = 0 : i64, scratch_operands = 0 : i64, tpu.core_type = #tpu.core_type<tc>, window_params = [{transform_indices = @transform_0, window_bounds = array<i64: 1, 4, 64>}, {pipeline_mode = #tpu.pipeline_mode<synchronous>, transform_indices = @transform_1, window_bounds = array<i64: 64, 32>}, {pipeline_mode = #tpu.pipeline_mode<synchronous>, transform_indices = @transform_2, window_bounds = array<i64: 2, 16, 2>}, {transform_indices = @transform_3, window_bounds = array<i64: 1, 2, 16, 32>}]} {
    %c0 = arith.constant 0 : index
    %c0_0 = arith.constant 0 : index
    %c0_1 = arith.constant 0 : index
    %0 = vector.load %arg2[%c0, %c0_0, %c0_1] : memref<1x4x64xbf16, #tpu.memory_space<vmem>>, vector<1x4x64xbf16>
    %1 = vector.shape_cast %0 : vector<1x4x64xbf16> to vector<4x64xbf16>
    %c0_2 = arith.constant 0 : index
    %c0_3 = arith.constant 0 : index
    %2 = vector.load %arg3[%c0_2, %c0_3] : memref<64x32xbf16, #tpu.memory_space<vmem>>, vector<64x32xbf16>
    %cst = arith.constant dense<0.000000e+00> : vector<4x32xf32>
    %3 = tpu.matmul %1, %2, %cst {dimension_numbers = #tpu.dot_dimension_numbers<[1], [0], [0], [1], [0, 0, 1, 1], [], []>} : vector<4x64xbf16>, vector<64x32xbf16>, vector<4x32xf32> -> vector<4x32xf32>
    %4 = vector.shape_cast %3 : vector<4x32xf32> to vector<2x2x32xf32>
    %5 = arith.truncf %4 : vector<2x2x32xf32> to vector<2x2x32xbf16>
    %c0_4 = arith.constant 0 : index
    %c0_5 = arith.constant 0 : index
    %c0_6 = arith.constant 0 : index
    %6 = vector.load %arg4[%c0_4, %c0_5, %c0_6] : memref<2x16x2xbf16, #tpu.memory_space<vmem>>, vector<2x16x2xbf16>
    "tpu.trace_start"() <{level = 10 : i32, message = "hvw,hwe->hve"}> : () -> ()
    %cst_7 = arith.constant dense<0.000000e+00> : vector<2x16x32xf32>
    %7 = tpu.matmul %6, %5, %cst_7 {dimension_numbers = #tpu.dot_dimension_numbers<[2], [1], [1], [2], [0, 0, 0, 1, 1, 2], [0], [0]>} : vector<2x16x2xbf16>, vector<2x2x32xbf16>, vector<2x16x32xf32> -> vector<2x16x32xf32>
    "tpu.trace_stop"() : () -> ()
    %8 = arith.truncf %7 : vector<2x16x32xf32> to vector<2x16x32xbf16>
    %c0_8 = arith.constant 0 : index
    %c0_9 = arith.constant 0 : index
    %c0_10 = arith.constant 0 : index
    %c0_11 = arith.constant 0 : index
    %9 = vector.load %arg5[%c0_8, %c0_9, %c0_10, %c0_11] : memref<1x2x16x32xbf16, #tpu.memory_space<vmem>>, vector<1x2x16x32xbf16>
    %10 = vector.shape_cast %9 : vector<1x2x16x32xbf16> to vector<2x16x32xbf16>
    %11 = vector.shape_cast %8 : vector<2x16x32xbf16> to vector<1x2x16x32xbf16>
    tpu.vector_store %arg5[%c0_8, %c0_9, %c0_10, %c0_11], %11 {strides = array<i32>} : memref<1x2x16x32xbf16, #tpu.memory_space<vmem>>, vector<1x2x16x32xbf16>,
    return
  }
  func.func @transform_0(%arg0: i32, %arg1: i32) -> (i32, i32, i32) {
    %c0_i32 = arith.constant 0 : i32
    %c0_i32_0 = arith.constant 0 : i32
    return %arg0, %arg1, %c0_i32 : i32, i32, i32
  }
  func.func @transform_1(%arg0: i32, %arg1: i32) -> (i32, i32) {
    %c0_i32 = arith.constant 0 : i32
    %c0_i32_0 = arith.constant 0 : i32
    %c0_i32_1 = arith.constant 0 : i32
    return %c0_i32, %c0_i32_0 : i32, i32
  }
  func.func @transform_2(%arg0: i32, %arg1: i32) -> (i32, i32, i32) {
    %c0_i32 = arith.constant 0 : i32
    %c0_i32_0 = arith.constant 0 : i32
    %c0_i32_1 = arith.constant 0 : i32
    %c0_i32_2 = arith.constant 0 : i32
    return %c0_i32, %c0_i32_0, %c0_i32_1 : i32, i32, i32
  }
  func.func @transform_3(%arg0: i32, %arg1: i32) -> (i32, i32, i32, i32) {
    %c0_i32 = arith.constant 0 : i32
    %c0_i32_0 = arith.constant 0 : i32
    %c0_i32_1 = arith.constant 0 : i32
    return %arg0, %arg1, %c0_i32, %c0_i32_0 : i32, i32, i32, i32
  }
}

</mosaic_0001>

<llo_original>
// kernel: tpu_custom_call.1
$region0: #{tpu_custom_call.1}
  #allocation0 [shape = 'u32[]', space=smem, size = 0x4, offset = 0x4, fixed_abs, tag = 'smem constant byte address 0x4 - core index']
  #allocation1 [shape = 'u32[144,128]{1,0:T(1,128)}', space=vmem, size = 0x12000, scoped, tag = 'internal scratch']
  %s0 = inlined_call_operand.vmem [shape: bf16[2,4,64], index: 0, kind: input, shape index: {}]
  %s1 = inlined_call_operand.vmem [shape: bf16[64,32], index: 1, kind: input, shape index: {}]
  %s2 = inlined_call_operand.vmem [shape: bf16[2,16,2], index: 2, kind: input, shape index: {}]
  %s3 = inlined_call_operand.hbm [shape: bf16[2,2,16,32], index: 3, kind: output, shape index: {}]
  %s4 = sld [smem:[#allocation0]]
  $region45: #{tpu_custom_call.1} parent=0
    _
  %s6 = ssub.s32 1, %s4
  %s7 = scalar_select 0, %s6, %s4
  $region1: #{tpu_custom_call.1} parent=0
    #allocation2 [shape = 'u8[16384]{0}', space=vmem, size = 0x4000, scoped, tag = 'output window, operand 0']
    #allocation3 [shape = 's32[2]{0}', space=sflag, size = 0x8, scoped, tag = 'scoped memory for tpu_custom_call.1']
    %8 = vsyncpa [#allocation3], 0
    %s9 = scalar_lea.sflag [#allocation3], 1
    %10 = vsyncpa %s9, 0
    loop: start=0, step=1, limit=4
    $region2: #{tpu_custom_call.1} parent=1 // loop_pre_header
      _
    $region3: #{tpu_custom_call.1} parent=1 // loop_header
      %s12 = sphi 0, %s16
      %p13 = scmp.ge.s32.totalorder %s12, 4
      %s19 = sphi 0, %s31
      %s20 = sphi 0, %s27
      %s21 = sphi 0, %s19
      %s22 = sphi 0, %s20
      %s23 = sphi 0, %s21
      %s24 = sphi 0, %s22
      %s36 = sphi 0, %s38
      %s39 = sphi 0, %s36
      %s40 = sphi 0, %s39
      %s56 = sphi 0, %s40
      %s60 = sphi 0, %s60
      %s62 = sphi 0, %s60
      %s63 = sphi 0, %s62
      %s77 = sphi 0, %s63
      %s81 = sphi 0, %s81
      %s83 = sphi 0, %s81
      %s84 = sphi 0, %s83
      %s98 = sphi 0, %s84
      %s106 = sphi 0, %s108
      %s109 = sphi 0, %s106
      %s110 = sphi 0, %s109
      %s126 = sphi 0, %s110
    $region4: #{tpu_custom_call.1} parent=1 // loop_header_branch
      %15 = sbr.rel (%p13) target = $region8
    $region5: #{tpu_custom_call.1} parent=1 // loop_body
      %s17 = ssub.s32 %s12, 1
      %s18 = ssub.s32 %s12, 2
      %s25 = sadd.s32 1, %s20
      %p26 = scmp.ge.s32.totalorder %s25, 1
      %s27 = scalar_select %p26, 0, %s25
      %s28 = sadd.s32 1, %s19
      %s29 = scalar_select %p26, %s28, %s19
      %p30 = scmp.ge.s32.totalorder %s29, 2
      %s31 = scalar_select %p30, 0, %s29
      %s32 = ssub.s32 %s19, %s31
      %s33 = ssub.s32 %s20, %s27
      %s34 = sor.u32 %s32, %s33
      %p35 = scmp.eq.s32.totalorder %s34, 0
      %s37 = sadd.s32 %s36, 1
      %s38 = scalar_select %p35, %s36, %s37
      %p41 = pneg %p35
      %p42 = scmp.eq.s32.totalorder %s12, 1
      %p43 = por %p41, %p42
      %p44 = scmp.ne.s32.totalorder %s36, %s39
      %p45 = scmp.eq.s32.totalorder %s12, 0
      %p46 = por %p44, %p45
      %p47 = scmp.ne.s32.totalorder %s36, %s39
      %p48 = scmp.eq.s32.totalorder %s17, 1
      %p49 = por %p47, %p48
      %p50 = scmp.ne.s32.totalorder %s39, %s40
      %p51 = scmp.eq.s32.totalorder %s17, 0
      %p52 = por %p50, %p51
      %p53 = scmp.ne.s32.totalorder %s39, %s40
      %p54 = scmp.eq.s32.totalorder %s18, 1
      %p55 = por %p53, %p54
      %p57 = scmp.ne.s32.totalorder %s40, %s56
      %p58 = scmp.eq.s32.totalorder %s18, 0
      %p59 = por %p57, %p58
      %s61 = sadd.s32 %s60, 1
      %p64 = scmp.eq.s32.totalorder %s12, 1
      %p65 = scmp.ne.s32.totalorder %s60, %s62
      %p66 = scmp.eq.s32.totalorder %s12, 0
      %p67 = por %p65, %p66
      %p68 = scmp.ne.s32.totalorder %s60, %s62
      %p69 = scmp.eq.s32.totalorder %s17, 1
      %p70 = por %p68, %p69
      %p71 = scmp.ne.s32.totalorder %s62, %s63
      %p72 = scmp.eq.s32.totalorder %s17, 0
      %p73 = por %p71, %p72
      %p74 = scmp.ne.s32.totalorder %s62, %s63
      %p75 = scmp.eq.s32.totalorder %s18, 1
      %p76 = por %p74, %p75
      %p78 = scmp.ne.s32.totalorder %s63, %s77
      %p79 = scmp.eq.s32.totalorder %s18, 0
      %p80 = por %p78, %p79
      %s82 = sadd.s32 %s81, 1
      %p85 = scmp.eq.s32.totalorder %s12, 1
      %p86 = scmp.ne.s32.totalorder %s81, %s83
      %p87 = scmp.eq.s32.totalorder %s12, 0
      %p88 = por %p86, %p87
      %p89 = scmp.ne.s32.totalorder %s81, %s83
      %p90 = scmp.eq.s32.totalorder %s17, 1
      %p91 = por %p89, %p90
      %p92 = scmp.ne.s32.totalorder %s83, %s84
      %p93 = scmp.eq.s32.totalorder %s17, 0
      %p94 = por %p92, %p93
      %p95 = scmp.ne.s32.totalorder %s83, %s84
      %p96 = scmp.eq.s32.totalorder %s18, 1
      %p97 = por %p95, %p96
      %p99 = scmp.ne.s32.totalorder %s84, %s98
      %p100 = scmp.eq.s32.totalorder %s18, 0
      %p101 = por %p99, %p100
      %s102 = ssub.s32 %s19, %s31
      %s103 = ssub.s32 %s20, %s27
      %s104 = sor.u32 %s102, %s103
      %p105 = scmp.eq.s32.totalorder %s104, 0
      %s107 = sadd.s32 %s106, 1
      %s108 = scalar_select %p105, %s106, %s107
      %p111 = pneg %p105
      %p112 = scmp.eq.s32.totalorder %s12, 1
      %p113 = por %p111, %p112
      %p114 = scmp.ne.s32.totalorder %s106, %s109
      %p115 = scmp.eq.s32.totalorder %s12, 0
      %p116 = por %p114, %p115
      %p117 = scmp.ne.s32.totalorder %s106, %s109
      %p118 = scmp.eq.s32.totalorder %s17, 1
      %p119 = por %p117, %p118
      %p120 = scmp.ne.s32.totalorder %s109, %s110
      %p121 = scmp.eq.s32.totalorder %s17, 0
      %p122 = por %p120, %p121
      %p123 = scmp.ne.s32.totalorder %s109, %s110
      %p124 = scmp.eq.s32.totalorder %s18, 1
      %p125 = por %p123, %p124
      %p127 = scmp.ne.s32.totalorder %s110, %s126
      %p128 = scmp.eq.s32.totalorder %s18, 0
      %p129 = por %p127, %p128
      %p130 = scmp.le.s32.totalorder 1, %s12
      %p131 = scmp.lt.s32.totalorder %s12, 3
      %p132 = pnand %p130, %p131
      %p133 = pneg %p132
      // Predicated region
      $region9: #{tpu_custom_call.1} parent=5 // pred_check
        _
      $region10: #{tpu_custom_call.1} parent=5 // pred_check_branch
        %135 = sbr.rel (%p132) target = $region12
      $region11: #{tpu_custom_call.1} parent=5 // pred_region
        %s136 = ssub.s32 %s12, 1
        // Predicated region
        $region13: #{tpu_custom_call.1} parent=11 // pred_check
          %p137 = pneg %p73
        $region14: #{tpu_custom_call.1} parent=11 // pred_check_branch
          %139 = sbr.rel (%p137) target = $region16
        $region15: #{tpu_custom_call.1} parent=11 // pred_region
          _
        $region16: #{tpu_custom_call.1} parent=11 // pred_fallthru
          _
        // Predicated region
        $region17: #{tpu_custom_call.1} parent=11 // pred_check
          %p140 = pneg %p94
        $region18: #{tpu_custom_call.1} parent=11 // pred_check_branch
          %142 = sbr.rel (%p140) target = $region20
        $region19: #{tpu_custom_call.1} parent=11 // pred_region
          _
        $region20: #{tpu_custom_call.1} parent=11 // pred_fallthru
          _
      $region12: #{tpu_custom_call.1} parent=5 // pred_fallthru
        _
      %p143 = scmp.lt.s32.totalorder %s12, 2
      // Predicated region
      $region21: #{tpu_custom_call.1} parent=5 // pred_check
        %p144 = pneg %p143
      $region22: #{tpu_custom_call.1} parent=5 // pred_check_branch
        %146 = sbr.rel (%p144) target = $region24
      $region23: #{tpu_custom_call.1} parent=5 // pred_region
        // Predicated region
        $region25: #{tpu_custom_call.1} parent=23 // pred_check
          %p147 = pneg %p46
        $region26: #{tpu_custom_call.1} parent=23 // pred_check_branch
          %149 = sbr.rel (%p147) target = $region28
        $region27: #{tpu_custom_call.1} parent=23 // pred_region
          %p150 = scmp.lt.s32.totalorder %s19, 1
          %s151 = scalar_select %p150, %s19, 1
          %p152 = scmp.lt.s32.totalorder %s20, 0
          %s153 = scalar_select %p152, %s20, 0
          %s154 = sadd.s32 %s153, %s151
          %s155 = smul.addr %s154, 2
          %s156 = scalar_lea.vmem %s0, %s155
        $region28: #{tpu_custom_call.1} parent=23 // pred_fallthru
          _
      $region24: #{tpu_custom_call.1} parent=5 // pred_fallthru
        _
      %p157 = scmp.le.s32.totalorder 1, %s12
      %p158 = scmp.lt.s32.totalorder %s12, 3
      %p159 = pnand %p157, %p158
      %p160 = pneg %p159
      // Predicated region
      $region29: #{tpu_custom_call.1} parent=5 // pred_check
        _
      $region30: #{tpu_custom_call.1} parent=5 // pred_check_branch
        %162 = sbr.rel (%p159) target = $region32
      $region31: #{tpu_custom_call.1} parent=5 // pred_region
        %s163 = ssub.s32 %s12, 1
        %p164 = scmp.lt.s32.totalorder %s21, 1
        %s165 = scalar_select %p164, %s21, 1
        %p166 = scmp.lt.s32.totalorder %s22, 0
        %s167 = scalar_select %p166, %s22, 0
        %s168 = sadd.s32 %s167, %s165
        %s169 = smul.addr %s168, 2
        %s170 = scalar_lea.vmem %s0, %s169
        %p171 = pneg %p52
        %p172 = pneg %p49
        %p173 = pneg %p73
        %p174 = pneg %p70
        %p175 = pneg %p94
        %p176 = pneg %p91
        %p177 = pneg %p122
        %p178 = pneg %p119
        %s179 = sand.u32 %s109, 1
        %s180 = scalar_lea.sflag [#allocation3], %s179
        %s181 = sand.u32 %s109, 1
        %s182 = smul.addr %s181, 16
        %s183 = scalar_lea.vmem [#allocation2], %s182
        %p184 = scmp.lt.s32.totalorder %s21, 1
        %s185 = scalar_select %p184, %s21, 1
        %p186 = scmp.lt.s32.totalorder %s22, 0
        %s187 = scalar_select %p186, %s22, 0
        %s188 = sadd.s32 %s187, %s185
        %s189 = smul.addr %s188, 2
        %s190 = scalar_lea.vmem %s0, %s189
        %s191 = smul.u32 2, %s22
        %v193 = vld [vmem:[%s190] sm:$0x3]
        %v194 = vld [vmem:[%s1] sm:$0xf]
        %v195 = vld [vmem:[%s1 + $0x4] sm:$0xf]
        %v196 = vld [vmem:[%s1 + $0x8] sm:$0xf]
        %v197 = vld [vmem:[%s1 + $0xc] sm:$0xf]
        %v198 = vld [vmem:[%s1 + $0x10] sm:$0xf]
        %v199 = vld [vmem:[%s1 + $0x14] sm:$0xf]
        %v200 = vld [vmem:[%s1 + $0x18] sm:$0xf]
        %v201 = vld [vmem:[%s1 + $0x1c] sm:$0xf]
        %v210 = vunpack.c.l.b16 %v194
        %v211 = vunpack.c.l.b16 %v195
        %v212 = vunpack.c.l.b16 %v196
        %v213 = vunpack.c.l.b16 %v197
        %v214 = vunpack.c.l.b16 %v198
        %v215 = vunpack.c.l.b16 %v199
        %v216 = vunpack.c.l.b16 %v200
        %v217 = vunpack.c.l.b16 %v201
        %v218 = vpack.c.b16 %v211, %v210
        %v219 = vpack.c.b16 %v213, %v212
        %v220 = vpack.c.b16 %v215, %v214
        %v221 = vpack.c.b16 %v217, %v216
        %vm226 = vcmask 523264
        %v228 = vsel %vm226, %v193, 0
        %230 = vmatprep.subr.bf16.mxu0 0
        %231 = vmatpush1.bf16.msra.mxu0 %v218
        %232 = vmatprep.subr.bf16.mxu0 0
        %233 = vmatpush1.bf16.msra.mxu0 %v219
        %234 = vmatprep.subr.bf16.mxu0 0
        %235 = vmatpush1.bf16.msra.mxu0 %v220
        %236 = vmatprep.subr.bf16.mxu0 0
        %237 = vmatpush1.bf16.msra.mxu0 %v221
        %238 = vmatprep.subr.bf16.mxu0 0
        %239 = vmatpush1.bf16.msra.mxu0 0
        %240 = vmatprep.subr.bf16.mxu0 0
        %241 = vmatpush1.bf16.msra.mxu0 0
        %242 = vmatprep.subr.bf16.mxu0 0
        %243 = vmatpush1.bf16.msra.mxu0 0
        %244 = vmatprep.subr.bf16.mxu0 0
        %245 = vmatpush1.bf16.msra.mxu0 0
        %246 = vmatprep.subr.bf16.mxu0 0
        %247 = vmatpush1.bf16.msra.mxu0 0
        %248 = vmatprep.subr.bf16.mxu0 0
        %249 = vmatpush1.bf16.msra.mxu0 0
        %250 = vmatprep.subr.bf16.mxu0 0
        %251 = vmatpush1.bf16.msra.mxu0 0
        %252 = vmatprep.subr.bf16.mxu0 0
        %253 = vmatpush1.bf16.msra.mxu0 0
        %254 = vmatprep.subr.bf16.mxu0 0
        %255 = vmatpush1.bf16.msra.mxu0 0
        %256 = vmatprep.subr.bf16.mxu0 0
        %257 = vmatpush1.bf16.msra.mxu0 0
        %258 = vmatprep.subr.bf16.mxu0 0
        %259 = vmatpush1.bf16.msra.mxu0 0
        %260 = vmatprep.subr.bf16.mxu0 0
        %261 = vmatpush1.bf16.msra.mxu0 0
        %262 = vmatprep.mubr.bf16.mxu0 0
        %263 = vmatmul.mubr.bf16.gmra.mrb[0].mxu0 %v228
        %v264 = vpop.f32.mrb[0].mxu0
        %v265 = vadd.f32 0.0, %v264
        %v266 = vpop.f32.mrb[0].mxu0
        %v267 = vpop.f32.mrb[0].mxu0
        %v268 = vpop.f32.mrb[0].mxu0
        %269 = vdwg.mxu0
        %v272 = vunpack.c.l.s4 1983009808
        %v273 = vunpack.c.0.s8 %v272
        %v274 = vlaneseq
        %v275 = vshrl.u32 %v274, 7
        %v276 = vsub.s32 %v273, %v275
        %v277 = vrot.slane %v265, %v276
        %v278 = vcombine.high %v277, %v277
        %v281 = vpack.c.bf16 %v277, %v277
        %v282 = vpack.c.bf16 %v278, %v278
        %v283 = vld [vmem:[%s2] sm:$0xf]
        %v284 = vld [vmem:[%s2 + $0x4] sm:$0xf]
        %v285 = vld [vmem:[%s2 + $0x8] sm:$0xf]
        %v286 = vld [vmem:[%s2 + $0xc] sm:$0xf]
        %v289 = vunpack.c.l.b16 %v283
        %v290 = vunpack.c.l.b16 %v284
        %v291 = vpack.c.b16 %v290, %v289
        %vm292 = vcmask 15360
        %v294 = vsel %vm292, %v291, 0
        %vm296 = vcmask 1040384
        %v298 = vsel %vm296, %v281, 0
        %300 = vmatprep.subr.bf16.mxu0 0
        %301 = vmatpush1.bf16.msra.mxu0 %v298
        %302 = vmatprep.subr.bf16.mxu0 0
        %303 = vmatpush1.bf16.msra.mxu0 0
        %304 = vmatprep.subr.bf16.mxu0 0
        %305 = vmatpush1.bf16.msra.mxu0 0
        %306 = vmatprep.subr.bf16.mxu0 0
        %307 = vmatpush1.bf16.msra.mxu0 0
        %308 = vmatprep.subr.bf16.mxu0 0
        %309 = vmatpush1.bf16.msra.mxu0 0
        %310 = vmatprep.subr.bf16.mxu0 0
        %311 = vmatpush1.bf16.msra.mxu0 0
        %312 = vmatprep.subr.bf16.mxu0 0
        %313 = vmatpush1.bf16.msra.mxu0 0
        %314 = vmatprep.subr.bf16.mxu0 0
        %315 = vmatpush1.bf16.msra.mxu0 0
        %316 = vmatprep.subr.bf16.mxu0 0
        %317 = vmatpush1.bf16.msra.mxu0 0
        %318 = vmatprep.subr.bf16.mxu0 0
        %319 = vmatpush1.bf16.msra.mxu0 0
        %320 = vmatprep.subr.bf16.mxu0 0
        %321 = vmatpush1.bf16.msra.mxu0 0
        %322 = vmatprep.subr.bf16.mxu0 0
        %323 = vmatpush1.bf16.msra.mxu0 0
        %324 = vmatprep.subr.bf16.mxu0 0
        %325 = vmatpush1.bf16.msra.mxu0 0
        %326 = vmatprep.subr.bf16.mxu0 0
        %327 = vmatpush1.bf16.msra.mxu0 0
        %328 = vmatprep.subr.bf16.mxu0 0
        %329 = vmatpush1.bf16.msra.mxu0 0
        %330 = vmatprep.subr.bf16.mxu0 0
        %331 = vmatpush1.bf16.msra.mxu0 0
        %332 = vmatprep.mubr.bf16.mxu0 0
        %333 = vmatmul.mubr.bf16.gmra.mrb[0].mxu0 %v294
        %v334 = vpop.f32.mrb[0].mxu0
        %v335 = vadd.f32 0.0, %v334
        %v336 = vpop.f32.mrb[0].mxu0
        %v337 = vpop.f32.mrb[0].mxu0
        %v338 = vadd.f32 0.0, %v337
        %v339 = vpop.f32.mrb[0].mxu0
        %340 = vdwg.mxu0
        %v343 = vunpack.c.l.b16 %v285
        %v344 = vunpack.c.l.b16 %v286
        %v345 = vpack.c.b16 %v344, %v343
        %v347 = vsel %vm292, %v345, 0
        %v350 = vsel %vm296, %v282, 0
        %352 = vmatprep.subr.bf16.mxu0 0
        %353 = vmatpush1.bf16.msra.mxu0 %v350
        %354 = vmatprep.subr.bf16.mxu0 0
        %355 = vmatpush1.bf16.msra.mxu0 0
        %356 = vmatprep.subr.bf16.mxu0 0
        %357 = vmatpush1.bf16.msra.mxu0 0
        %358 = vmatprep.subr.bf16.mxu0 0
        %359 = vmatpush1.bf16.msra.mxu0 0
        %360 = vmatprep.subr.bf16.mxu0 0
        %361 = vmatpush1.bf16.msra.mxu0 0
        %362 = vmatprep.subr.bf16.mxu0 0
        %363 = vmatpush1.bf16.msra.mxu0 0
        %364 = vmatprep.subr.bf16.mxu0 0
        %365 = vmatpush1.bf16.msra.mxu0 0
        %366 = vmatprep.subr.bf16.mxu0 0
        %367 = vmatpush1.bf16.msra.mxu0 0
        %368 = vmatprep.subr.bf16.mxu0 0
        %369 = vmatpush1.bf16.msra.mxu0 0
        %370 = vmatprep.subr.bf16.mxu0 0
        %371 = vmatpush1.bf16.msra.mxu0 0
        %372 = vmatprep.subr.bf16.mxu0 0
        %373 = vmatpush1.bf16.msra.mxu0 0
        %374 = vmatprep.subr.bf16.mxu0 0
        %375 = vmatpush1.bf16.msra.mxu0 0
        %376 = vmatprep.subr.bf16.mxu0 0
        %377 = vmatpush1.bf16.msra.mxu0 0
        %378 = vmatprep.subr.bf16.mxu0 0
        %379 = vmatpush1.bf16.msra.mxu0 0
        %380 = vmatprep.subr.bf16.mxu0 0
        %381 = vmatpush1.bf16.msra.mxu0 0
        %382 = vmatprep.subr.bf16.mxu0 0
        %383 = vmatpush1.bf16.msra.mxu0 0
        %384 = vmatprep.mubr.bf16.mxu0 0
        %385 = vmatmul.mubr.bf16.gmra.mrb[0].mxu0 %v347
        %v386 = vpop.f32.mrb[0].mxu0
        %v387 = vadd.f32 0.0, %v386
        %v388 = vpop.f32.mrb[0].mxu0
        %v389 = vpop.f32.mrb[0].mxu0
        %v390 = vadd.f32 0.0, %v389
        %v391 = vpop.f32.mrb[0].mxu0
        %392 = vdwg.mxu0
        %v393 = vpack.c.bf16 %v338, %v335
        %v394 = vpack.c.bf16 %v390, %v387
        %v397 = vunpack.c.l.b16 %v393
        %v398 = vunpack.c.h.b16 %v393
        %v399 = vunpack.c.l.b16 %v394
        %v400 = vunpack.c.h.b16 %v394
        %v401 = vpack.c.b16 %v397, %v397
        %v402 = vpack.c.b16 %v398, %v398
        %v403 = vpack.c.b16 %v399, %v399
        %v404 = vpack.c.b16 %v400, %v400
        %vm409 = vcmask 257024
        %410 = vst.msk [vmem:[%s183] sm:$0xf] %vm409, %v401
        %411 = vst.msk [vmem:[%s183 + $0x4] sm:$0xf] %vm409, %v402
        %412 = vst.msk [vmem:[%s183 + $0x8] sm:$0xf] %vm409, %v403
        %413 = vst.msk [vmem:[%s183 + $0xc] sm:$0xf] %vm409, %v404
        %s414 = sand.u32 %s109, 1
        %s415 = scalar_lea.sflag [#allocation3], %s414
        %s416 = sand.u32 %s109, 1
        %s417 = smul.addr %s416, 16
        %s418 = scalar_lea.vmem [#allocation2], %s417
        // Predicated region
        $region33: #{tpu_custom_call.1} parent=31 // pred_check
          %p419 = pneg %p119
        $region34: #{tpu_custom_call.1} parent=31 // pred_check_branch
          %421 = sbr.rel (%p419) target = $region36
        $region35: #{tpu_custom_call.1} parent=31 // pred_region
          %s422 = smul.u32 2, %s22
          %s424 = ssub.s32 256, 256
          %425 = vsyncadd %s415, %s424
          %s426 = smul.addr %s422, 2
          %s427 = smul.addr %s21, 4
          %s428 = sadd.s32 %s426, %s427
          %s429 = smul.addr %s428, 64
          %s430 = scalar_lea.hbm %s3, %s429
          %s431 = sshll.u32 %s418, 4
          %s432 = int_to_ptr.vmem [resolvable:$true] %s431
          %437 = dma.vmem_to_hbm [thread:$0]  %s432, 256, %s430, %s415, 64, 64, 4
        $region36: #{tpu_custom_call.1} parent=31 // pred_fallthru
          _
      $region32: #{tpu_custom_call.1} parent=5 // pred_fallthru
        _
      %p438 = scmp.le.s32.totalorder 2, %s12
      // Predicated region
      $region37: #{tpu_custom_call.1} parent=5 // pred_check
        %p439 = pneg %p438
      $region38: #{tpu_custom_call.1} parent=5 // pred_check_branch
        %441 = sbr.rel (%p439) target = $region40
      $region39: #{tpu_custom_call.1} parent=5 // pred_region
        %s442 = ssub.s32 %s12, 2
        // Predicated region
        $region41: #{tpu_custom_call.1} parent=39 // pred_check
          %p443 = pneg %p125
        $region42: #{tpu_custom_call.1} parent=39 // pred_check_branch
          %445 = sbr.rel (%p443) target = $region44
        $region43: #{tpu_custom_call.1} parent=39 // pred_region
          %s446 = sand.u32 %s110, 1
          %s447 = scalar_lea.sflag [#allocation3], %s446
          %s448 = sand.u32 %s110, 1
          %s449 = smul.addr %s448, 16
          %s450 = scalar_lea.vmem [#allocation2], %s449
          %451 = dma.done %s447, 256
        $region44: #{tpu_custom_call.1} parent=39 // pred_fallthru
          _
      $region40: #{tpu_custom_call.1} parent=5 // pred_fallthru
        _
    $region6: #{tpu_custom_call.1} parent=1 // loop_footer
      %s16 = sadd.s32 1, %s12
    $region7: #{tpu_custom_call.1} parent=1 // loop_footer_branch
      %11 = sbr.rel target = $region3
    $region8: #{tpu_custom_call.1} parent=1 // loop_exit
      _
    %452 = vsyncpa [#allocation3], 1
    %s453 = scalar_lea.sflag [#allocation3], 1
    %454 = vsyncpa %s453, 1

</llo_original>
